<compile_context>
chip_gen: v6e
topology: v6e:2x2x1
jax: 0.10.0
libtpu: 0.0.40
codegen_flags: <defaults>
</compile_context>

<pallas_src>
import functools

import jax
import jax.numpy as jnp
from jax import lax
from jax.experimental import pallas as pl
from jax.experimental.pallas import tpu as pltpu

HIDDEN = 256
NUM_GROUPS = 16
GSZ = HIDDEN // NUM_GROUPS   # 16 channels per group (contiguous lanes)
GN_EPS = 1e-5                # F.group_norm default eps
STD_EPS = 1e-5               # the +1e-05 in forward()
HEAD_PAD = 128               # fused head output width (lane-dense store)


def _round_up(x, m):
    return ((x + m - 1) // m) * m


# ---------------------------------------------------------------------------
# pltpu.roll direction probe (run once): the segmented group reduction needs to
# know whether roll(x, s)[j] == x[j - s]  (jnp.roll convention) or x[j + s].
# ---------------------------------------------------------------------------
_ROLL_JNP_STYLE = None


def _roll_probe_kernel(x_ref, o_ref):
    o_ref[...] = pltpu.roll(x_ref[...], 1, axis=1)


def _roll_matches_jnp_roll():
    """Detect pltpu.roll rotation direction (cached; do not call under jit)."""
    global _ROLL_JNP_STYLE
    if _ROLL_JNP_STYLE is None:
        x = lax.broadcasted_iota(jnp.int32, (8, 128), 1)
        out = pl.pallas_call(
            _roll_probe_kernel,
            out_shape=jax.ShapeDtypeStruct((8, 128), jnp.int32),
        )(x)
        # jnp.roll convention: out[0,0] = x[0,127] = 127; opposite: out[0,0] = 1.
        _ROLL_JNP_STYLE = bool(int(out[0, 0]) == 127)
    return _ROLL_JNP_STYLE


# ---------------------------------------------------------------------------
# Kernel
# ---------------------------------------------------------------------------
def _critic_kernel(xa_ref, w1_ref, b1_ref, w2_ref, b2_ref, w3_ref, b3_ref,
                   wh_ref, bh_ref, out_ref, *, double_layer, roll_jnp_style):
    f32 = jnp.float32
    bt = out_ref.shape[0]

    # Hoisted once per grid step: in-group lane index and the 4 butterfly masks.
    lane_in_group = lax.broadcasted_iota(jnp.int32, (bt, HIDDEN), 1) % GSZ
    ge_mask = {s: lane_in_group >= s for s in (1, 2, 4, 8)}

    def group_mean(v):
        # Sum over each contiguous group of GSZ=16 lanes, broadcast to every lane of
        # the group, via a within-group cyclic butterfly (XLU rolls + VPU selects/adds).
        s = v
        for shift in (1, 2, 4, 8):
            if roll_jnp_style:
                fwd = pltpu.roll(s, shift, axis=1)                    # s[j - shift]
                wrap = pltpu.roll(s, HIDDEN - (GSZ - shift), axis=1)  # s[j - shift + GSZ]
            else:
                fwd = pltpu.roll(s, HIDDEN - shift, axis=1)           # s[j - shift]
                wrap = pltpu.roll(s, GSZ - shift, axis=1)             # s[j - shift + GSZ]
            s = s + jnp.where(ge_mask[shift], fwd, wrap)
        return s * (1.0 / GSZ)

    def gn_relu(h):
        # GroupNorm(16, no affine) + ReLU. Two-pass variance; rsqrt on the EUP.
        mean = group_mean(h)
        d = h - mean
        var = group_mean(d * d)
        inv = lax.rsqrt(var + GN_EPS)
        return jnp.maximum(d * inv, 0.0)

    # fc1 on the packed [x | a | 0] input: one lane-aligned K=128 matmul.
    h = jnp.dot(xa_ref[...], w1_ref[...], preferred_element_type=f32) + b1_ref[...]
    h = gn_relu(h)
    h = gn_relu(jnp.dot(h, w2_ref[...], preferred_element_type=f32) + b2_ref[...])
    if double_layer:  # static (args.double_layer in the original script)
        h = gn_relu(jnp.dot(h, w3_ref[...], preferred_element_type=f32) + b3_ref[...])

    # Fused heads: column 0 = estimate (fc4), column 1 = std path (fc_std), rest padding.
    z = jnp.dot(h, wh_ref[...], preferred_element_type=f32) + bh_ref[...]   # (Bt, 128)
    col = lax.broadcasted_iota(jnp.int32, z.shape, 1)
    # PyTorch softplus (threshold=20) + 1e-5, applied only to the std column.
    sp = jnp.where(z > 20.0, z, jnp.log1p(jnp.exp(jnp.minimum(z, 20.0)))) + STD_EPS
    out_ref[...] = jnp.where(col == 1, sp, z).astype(out_ref.dtype)


# ---------------------------------------------------------------------------
# Wrapper
# ---------------------------------------------------------------------------
def gaussian_critic(x, a, params, *, double_layer=True, block_b=512):
    """params = (w1, b1, w2, b2, w3, b3, w4, b4, ws, bs); weights are (in, out), biases (1, out)."""
    w1, b1, w2, b2, w3, b3, w4, b4, ws, bs = (p.astype(jnp.float32) for p in params)
    B, obs_dim = x.shape
    act_dim = a.shape[1]
    in_dim = obs_dim + act_dim
    in_pad = _round_up(in_dim, 128)

    # Batch tile: multiple of 8 (sublane); capped at block_b; for small/medium batches
    # shrink so the grid has >= 2 steps (feeds both v7x TensorCores; harmless elsewhere).
    Bt = min(block_b, _round_up(B, 8))
    if B > 8:
        Bt = min(Bt, _round_up(pl.cdiv(B, 2), 8))
    Bp = _round_up(B, Bt)
    grid = Bp // Bt

    # Pack [x | a] into one zero-padded lane-dense buffer; this also serves as the batch
    # pad (no separate whole-batch pad round trip).
    xa = jnp.zeros((Bp, in_pad), jnp.float32)
    xa = xa.at[:B, :obs_dim].set(x.astype(jnp.float32))
    xa = xa.at[:B, obs_dim:in_dim].set(a.astype(jnp.float32))

    # Zero-pad fc1's weight to K=128; fuse the two heads into one lane-dense weight/bias.
    w1p = jnp.zeros((in_pad, HIDDEN), jnp.float32).at[:in_dim, :].set(w1)
    wh = jnp.zeros((HIDDEN, HEAD_PAD), jnp.float32).at[:, 0:1].set(w4).at[:, 1:2].set(ws)
    bh = jnp.zeros((1, HEAD_PAD), jnp.float32).at[:, 0:1].set(b4).at[:, 1:2].set(bs)

    def act_spec(width):
        return pl.BlockSpec((Bt, width), lambda i: (i, 0))

    def resident_spec(arr):
        return pl.BlockSpec(arr.shape, lambda i: (0, 0))

    inputs = (xa, w1p, b1, w2, b2, w3, b3, wh, bh)
    in_specs = [act_spec(in_pad)] + [resident_spec(p) for p in inputs[1:]]

    kernel = functools.partial(_critic_kernel, double_layer=double_layer,
                               roll_jnp_style=_roll_matches_jnp_roll())
    out = pl.pallas_call(
        kernel,
        grid=(grid,),
        out_shape=jax.ShapeDtypeStruct((Bp, HEAD_PAD), jnp.float32),
        in_specs=in_specs,
        out_specs=act_spec(HEAD_PAD),
        compiler_params=pltpu.CompilerParams(
            dimension_semantics=("parallel",),
            vmem_limit_bytes=32 * 1024 * 1024,
        ),
    )(*inputs)

    estimate = out[:B, 0:1]
    std = out[:B, 1:2]
    return estimate, std


# ---------------------------------------------------------------------------
# Reference + test harness
# ---------------------------------------------------------------------------
def _init_linear(key, fan_in, fan_out):
    # Matches torch.nn.Linear default init: U(-1/sqrt(fan_in), 1/sqrt(fan_in)) for W and b.
    kw, kb = jax.random.split(key)
    bound = 1.0 / jnp.sqrt(jnp.float32(fan_in))
    w = jax.random.uniform(kw, (fan_in, fan_out), jnp.float32, -bound, bound)
    b = jax.random.uniform(kb, (1, fan_out), jnp.float32, -bound, bound)
    return w, b


def _reference(x, a, params, double_layer=True):
    w1, b1, w2, b2, w3, b3, w4, b4, ws, bs = params
    xa = jnp.concatenate([x, a], axis=1).astype(jnp.float32)

    def gn_relu(h):
        hg = h.reshape(h.shape[0], NUM_GROUPS, GSZ)
        m = hg.mean(-1, keepdims=True)
        v = hg.var(-1, keepdims=True)
        hn = ((hg - m) * lax.rsqrt(v + GN_EPS)).reshape(h.shape)
        return jnp.maximum(hn, 0.0)

    h = gn_relu(xa @ w1 + b1)
    h = gn_relu(h @ w2 + b2)
    if double_layer:
        h = gn_relu(h @ w3 + b3)
    est = h @ w4 + b4
    std = jax.nn.softplus(h @ ws + bs) + STD_EPS
    return est, std


if __name__ == "__main__":
    obs_dim, act_dim, batch = 16, 4, 2
    in_dim = obs_dim + act_dim

    key = jax.random.PRNGKey(0)
    k_x, k_a, k_x2, k_a2, k1, k2, k3, k4, k5 = jax.random.split(key, 9)
    x = jax.random.normal(k_x, (batch, obs_dim), jnp.float32)
    a = jax.random.normal(k_a, (batch, act_dim), jnp.float32)

    w1, b1 = _init_linear(k1, in_dim, HIDDEN)
    w2, b2 = _init_linear(k2, HIDDEN, HIDDEN)
    w3, b3 = _init_linear(k3, HIDDEN, HIDDEN)
    w4, b4 = _init_linear(k4, HIDDEN, 1)
    ws, bs = _init_linear(k5, HIDDEN, 1)
    params = (w1, b1, w2, b2, w3, b3, w4, b4, ws, bs)

    # Small batch, double_layer=True
    est, std = gaussian_critic(x, a, params, double_layer=True)
    jax.block_until_ready((est, std))
    est_ref, std_ref = _reference(x, a, params, double_layer=True)
    assert est.shape == (batch, 1) and std.shape == (batch, 1)
    assert jnp.allclose(est, est_ref, atol=1e-4, rtol=1e-4), "estimate mismatch"
    assert jnp.allclose(std, std_ref, atol=1e-4, rtol=1e-4), "std mismatch"

    # double_layer=False path
    est2, std2 = gaussian_critic(x, a, params, double_layer=False)
    jax.block_until_ready((est2, std2))
    est2_ref, std2_ref = _reference(x, a, params, double_layer=False)
    assert jnp.allclose(est2, est2_ref, atol=1e-4, rtol=1e-4), "estimate mismatch (single)"
    assert jnp.allclose(std2, std2_ref, atol=1e-4, rtol=1e-4), "std mismatch (single)"

    # Multi-tile path (grid >= 2, padded tail block)
    x3 = jax.random.normal(k_x2, (50, obs_dim), jnp.float32)
    a3 = jax.random.normal(k_a2, (50, act_dim), jnp.float32)
    est3, std3 = gaussian_critic(x3, a3, params, double_layer=True)
    jax.block_until_ready((est3, std3))
    est3_ref, std3_ref = _reference(x3, a3, params, double_layer=True)
    assert est3.shape == (50, 1) and std3.shape == (50, 1)
    assert jnp.allclose(est3, est3_ref, atol=1e-4, rtol=1e-4), "estimate mismatch (multi-tile)"
    assert jnp.allclose(std3, std3_ref, atol=1e-4, rtol=1e-4), "std mismatch (multi-tile)"

    print("KERNEL_OK")
</pallas_src>

<mosaic_0001>
module attributes {stable_mosaic.version = 11 : i64} {
  func.func @_roll_probe_kernel(%arg0: memref<8x128xi32, #tpu.memory_space<vmem>>, %arg1: memref<8x128xi32, #tpu.memory_space<vmem>>) attributes {dimension_semantics = [], scalar_prefetch = 0 : i64, scratch_operands = 0 : i64, tpu.core_type = #tpu.core_type<tc>} {
    %c0 = arith.constant 0 : index
    %c0_0 = arith.constant 0 : index
    %0 = vector.load %arg0[%c0, %c0_0] : memref<8x128xi32, #tpu.memory_space<vmem>>, vector<8x128xi32>
    %c1_i32 = arith.constant 1 : i32
    %1 = tpu.dynamic_rotate %0 by %c1_i32 dim 1 : vector<8x128xi32>, i32 -> vector<8x128xi32>
    %c0_1 = arith.constant 0 : index
    %c0_2 = arith.constant 0 : index
    %2 = vector.load %arg1[%c0_1, %c0_2] : memref<8x128xi32, #tpu.memory_space<vmem>>, vector<8x128xi32>
    tpu.vector_store %arg1[%c0_1, %c0_2], %1 {strides = array<i32>} : memref<8x128xi32, #tpu.memory_space<vmem>>, vector<8x128xi32>,
    return
  }
}

</mosaic_0001>

<llo_original>
// kernel: tpu_custom_call.1
$region0: #{tpu_custom_call.1}
  #allocation0 [shape = 'u32[]', space=smem, size = 0x4, offset = 0x4, fixed_abs, tag = 'smem constant byte address 0x4 - core index']
  #allocation1 [shape = 'u32[144,128]{1,0:T(1,128)}', space=vmem, size = 0x12000, scoped, tag = 'internal scratch']
  %s0 = inlined_call_operand.hbm [shape: s32[8,128], index: 0, kind: input, shape index: {}]
  %s1 = inlined_call_operand.hbm [shape: s32[8,128], index: 1, kind: output, shape index: {}]
  %s2 = sld [smem:[#allocation0]]
  $region18: #{tpu_custom_call.1} parent=0
    _
  %s4 = ssub.s32 1, %s2
  %s5 = scalar_select 0, %s4, %s2
  $region1: #{tpu_custom_call.1} parent=0
    #allocation2 [shape = 'u8[4096]{0}', space=vmem, size = 0x1000, scoped, tag = 'input window, operand 0, single buffered']
    #allocation3 [shape = 's32[1]{0}', space=sflag, size = 0x4, scoped, tag = 'scoped memory for tpu_custom_call.1']
    #allocation4 [shape = 's32[1]{0}', space=sflag, size = 0x4, scoped, tag = 'scoped memory for tpu_custom_call.1']
    #allocation5 [shape = 'u8[4096]{0}', space=vmem, size = 0x1000, scoped, tag = 'output window, operand 0, single buffered']
    %6 = vsyncpa [#allocation3], 0
    %7 = vsyncpa [#allocation4], 0
    // Predicated region
    $region2: #{tpu_custom_call.1} parent=1 // pred_check
      _
    $region3: #{tpu_custom_call.1} parent=1 // pred_check_branch
      %9 = sbr.rel (0) target = $region5
    $region4: #{tpu_custom_call.1} parent=1 // pred_region
      %s11 = ssub.s32 128, 128
      %12 = vsyncadd [#allocation3], %s11
      %s14 = sshll.u32 [#allocation2], 4
      %s15 = int_to_ptr.vmem [resolvable:$true] %s14
      %17 = dma.hbm_to_vmem [thread:$0]  %s0, 128, %s15, [#allocation3]
    $region5: #{tpu_custom_call.1} parent=1 // pred_fallthru
      _
    // Predicated region
    $region6: #{tpu_custom_call.1} parent=1 // pred_check
      _
    $region7: #{tpu_custom_call.1} parent=1 // pred_check_branch
      %19 = sbr.rel (0) target = $region9
    $region8: #{tpu_custom_call.1} parent=1 // pred_region
      %20 = dma.done [#allocation3], 128
    $region9: #{tpu_custom_call.1} parent=1 // pred_fallthru
      _
    %v21 = vld [vmem:[#allocation2] sm:$0xff]
    %22 = vrot.lane.b32.xlu0 %v21, 1
    %v23 = vpop.permute.xlu0 %22
    %24 = vst [vmem:[#allocation5] sm:$0xff] %v23
    // Predicated region
    $region10: #{tpu_custom_call.1} parent=1 // pred_check
      _
    $region11: #{tpu_custom_call.1} parent=1 // pred_check_branch
      %26 = sbr.rel (0) target = $region13
    $region12: #{tpu_custom_call.1} parent=1 // pred_region
      %s28 = ssub.s32 128, 128
      %29 = vsyncadd [#allocation4], %s28
      %s31 = sshll.u32 [#allocation5], 4
      %s32 = int_to_ptr.vmem [resolvable:$true] %s31
      %34 = dma.vmem_to_hbm [thread:$0]  %s32, 128, %s1, [#allocation4]
    $region13: #{tpu_custom_call.1} parent=1 // pred_fallthru
      _
    // Predicated region
    $region14: #{tpu_custom_call.1} parent=1 // pred_check
      _
    $region15: #{tpu_custom_call.1} parent=1 // pred_check_branch
      %36 = sbr.rel (0) target = $region17
    $region16: #{tpu_custom_call.1} parent=1 // pred_region
      %37 = dma.done [#allocation4], 128
    $region17: #{tpu_custom_call.1} parent=1 // pred_fallthru
      _
    %38 = vsyncpa [#allocation3], 1
    %39 = vsyncpa [#allocation4], 1

</llo_original>
